<compile_context>
chip_gen: v7x
topology: tpu7x:2x2x1
jax: 0.10.0
libtpu: 0.0.40
codegen_flags: <defaults>
</compile_context>

<pallas_src>
import jax
import jax.numpy as jnp
from jax.experimental import pallas as pl
from jax.experimental.pallas import tpu as pltpu


def _round_up(x, m):
    return ((x + m - 1) // m) * m


def _conv1x1_kernel(w_ref, x_ref, b_ref, o_ref):
    # w_ref: (Cout, Cin)  x_ref: (Cin, TS)  b_ref: (Cout, 1)  o_ref: (Cout, TS)
    acc = jnp.dot(w_ref[...], x_ref[...], preferred_element_type=jnp.float32)
    o_ref[...] = (acc + b_ref[...]).astype(o_ref.dtype)


def _pick_tile_s(n, cin, cout, s, dtype_bytes):
    """Roofline-sized spatial tile.

    Per grid step we move (cin + cout) * tile_s * dtype_bytes over HBM.
    Target ~4 MiB of traffic per step so the ~0.35 us fixed per-step overhead
    is a small fraction of the DMA time even on v7x (~3.2 TB/s / TC), while
    capping the double-buffered pipeline footprint at ~16 MiB so it fits every
    generation's scoped-VMEM budget (16/32/32 MiB defaults on v5e/v6e/v7x,
    64 MiB physical on v7x).
    """
    per_col = (cin + cout) * dtype_bytes
    target_bytes = 4 << 20          # ~4 MiB of HBM traffic per grid step
    vmem_buf_budget = 16 << 20      # double-buffered x + out blocks

    tile_s = _round_up(max(128, target_bytes // per_col), 128)
    max_tile = max(128, (vmem_buf_budget // (2 * per_col)) // 128 * 128)
    tile_s = min(tile_s, max_tile)
    # Never larger than the (128-rounded) spatial extent.
    tile_s = min(tile_s, _round_up(s, 128))

    # v7x megacore: keep at least 2 total grid steps so both TensorCores
    # get work (on v5e/v6e this is harmless).
    while n * ((s + tile_s - 1) // tile_s) < 2 and tile_s > 128:
        tile_s = max(128, _round_up(tile_s // 2, 128))
    return tile_s


def conv_1x1(x_ncdhw, weight, bias, *, tile_s=None):
    """1x1x1 Conv3d forward (groups=1).

    x_ncdhw : (N, Cin, D, H, W)
    weight  : (Cout, Cin) or raw Conv3d weight (Cout, Cin, 1, 1, 1)
    bias    : (Cout,)
    returns : (N, Cout, D, H, W)
    """
    n, cin, d, h, w = x_ncdhw.shape
    if weight.ndim == 5:
        weight = weight.reshape(weight.shape[0], weight.shape[1])
    cout = weight.shape[0]
    s = d * h * w
    dtype_bytes = jnp.dtype(x_ncdhw.dtype).itemsize

    if tile_s is None:
        tile_s = _pick_tile_s(n, cin, cout, s, dtype_bytes)
    else:
        tile_s = min(_round_up(int(tile_s), 128), _round_up(s, 128))

    num_tiles = pl.cdiv(s, tile_s)

    # Native layout, no host-side pad/slice.  The ragged last block (when
    # s % tile_s != 0) is handled by Pallas: out-of-range input lanes read
    # garbage (harmless — the contraction is over Cin only, never over the
    # S/lane axis) and out-of-range output lanes are masked on writeback.
    x3d = x_ncdhw.reshape(n, cin, s)
    b2d = bias.reshape(cout, 1)      # broadcast over lanes inside the kernel

    # VMEM footprint: double-buffered x + out blocks plus resident weight/bias.
    buf_bytes = 2 * (cin + cout) * tile_s * dtype_bytes
    wb_bytes = (cout * cin + cout) * jnp.dtype(weight.dtype).itemsize
    vmem_limit = min(int(buf_bytes * 1.5) + wb_bytes + (4 << 20), 48 << 20)
    vmem_limit = max(vmem_limit, 16 << 20)

    flops = 2 * n * s * cin * cout
    bytes_accessed = n * s * (cin + cout) * dtype_bytes + wb_bytes

    out3d = pl.pallas_call(
        _conv1x1_kernel,
        out_shape=jax.ShapeDtypeStruct((n, cout, s), x_ncdhw.dtype),
        grid_spec=pltpu.PrefetchScalarGridSpec(
            num_scalar_prefetch=0,
            grid=(n, num_tiles),
            in_specs=[
                # Weight + bias: resident, same block every step.
                # TODO(synk): add a cout grid axis (tile the weight) if
                # cout*cin*bytes ever grows to several MiB (v7x VMEM headroom);
                # unnecessary for this module's small channel counts.
                pl.BlockSpec((cout, cin), lambda b, i: (0, 0)),
                # x block: (Cin, tile_s) -- batch dim squeezed, S lane-dense.
                pl.BlockSpec((None, cin, tile_s), lambda b, i: (b, 0, i)),
                pl.BlockSpec((cout, 1), lambda b, i: (0, 0)),
            ],
            # Lane-dense output block (Cout, tile_s) -> unmasked stores.
            out_specs=pl.BlockSpec((None, cout, tile_s), lambda b, i: (b, 0, i)),
        ),
        compiler_params=pltpu.CompilerParams(
            dimension_semantics=("parallel", "parallel"),
            vmem_limit_bytes=vmem_limit),
        cost_estimate=pl.CostEstimate(
            flops=flops, bytes_accessed=bytes_accessed, transcendentals=0),
    )(weight, x3d, b2d)

    return out3d.reshape(n, cout, d, h, w)


def _reference(x, weight, bias):
    return jnp.einsum("ncdhw,oc->nodhw", x, weight) + bias[None, :, None, None, None]


if __name__ == "__main__":
    # TODO(synk): groups > 1 not implemented (module default groups=1 is used).
    key = jax.random.PRNGKey(0)
    kx, kw, kb, kx2, kw2, kb2 = jax.random.split(key, 6)

    # --- main test: module-scale shapes ----------------------------------
    N, Cin, Cout, D, H, W = 2, 4, 8, 8, 8, 8
    x = jax.random.normal(kx, (N, Cin, D, H, W), dtype=jnp.float32)
    fan_in = Cin  # kernel volume = 1
    bound = 1.0 / (fan_in ** 0.5)
    weight = jax.random.uniform(kw, (Cout, Cin), jnp.float32, -bound, bound)
    bias = jax.random.uniform(kb, (Cout,), jnp.float32, -bound, bound)

    out = conv_1x1(x, weight, bias)
    out = jax.block_until_ready(out)
    ref = _reference(x, weight, bias)
    assert out.shape == (N, Cout, D, H, W)
    assert jnp.allclose(out, ref, atol=1e-5, rtol=1e-5)

    # --- ragged-tail test: S not a multiple of the tile (no host pad/slice)
    N2, Cin2, Cout2, D2, H2, W2 = 1, 3, 5, 5, 6, 7   # S = 210
    x2 = jax.random.normal(kx2, (N2, Cin2, D2, H2, W2), dtype=jnp.float32)
    bound2 = 1.0 / (Cin2 ** 0.5)
    weight2 = jax.random.uniform(kw2, (Cout2, Cin2), jnp.float32, -bound2, bound2)
    bias2 = jax.random.uniform(kb2, (Cout2,), jnp.float32, -bound2, bound2)

    out2 = conv_1x1(x2, weight2, bias2)
    out2 = jax.block_until_ready(out2)
    ref2 = _reference(x2, weight2, bias2)
    assert out2.shape == (N2, Cout2, D2, H2, W2)
    assert jnp.allclose(out2, ref2, atol=1e-5, rtol=1e-5)

    print("KERNEL_OK")
</pallas_src>

<mosaic_0001>
module attributes {stable_mosaic.version = 11 : i64} {
  func.func @_conv1x1_kernel(%arg0: i32, %arg1: i32, %arg2: memref<8x4xf32, #tpu.memory_space<vmem>>, %arg3: memref<1x4x512xf32, #tpu.memory_space<vmem>>, %arg4: memref<8x1xf32, #tpu.memory_space<vmem>>, %arg5: memref<1x8x512xf32, #tpu.memory_space<vmem>>) attributes {dimension_semantics = [#tpu.dimension_semantics<parallel>, #tpu.dimension_semantics<parallel>], iteration_bounds = array<i64: 2, 1>, scalar_prefetch = 0 : i64, scratch_operands = 0 : i64, tpu.core_type = #tpu.core_type<tc>, window_params = [{pipeline_mode = #tpu.pipeline_mode<synchronous>, transform_indices = @transform_0, window_bounds = array<i64: 8, 4>}, {transform_indices = @transform_1, window_bounds = array<i64: 1, 4, 512>}, {pipeline_mode = #tpu.pipeline_mode<synchronous>, transform_indices = @transform_2, window_bounds = array<i64: 8, 1>}, {transform_indices = @transform_3, window_bounds = array<i64: 1, 8, 512>}]} {
    %c0 = arith.constant 0 : index
    %c0_0 = arith.constant 0 : index
    %0 = vector.load %arg2[%c0, %c0_0] : memref<8x4xf32, #tpu.memory_space<vmem>>, vector<8x4xf32>
    %c0_1 = arith.constant 0 : index
    %c0_2 = arith.constant 0 : index
    %c0_3 = arith.constant 0 : index
    %1 = vector.load %arg3[%c0_1, %c0_2, %c0_3] : memref<1x4x512xf32, #tpu.memory_space<vmem>>, vector<1x4x512xf32>
    %2 = vector.shape_cast %1 : vector<1x4x512xf32> to vector<4x512xf32>
    %cst = arith.constant dense<0.000000e+00> : vector<8x512xf32>
    %3 = tpu.matmul %0, %2, %cst {dimension_numbers = #tpu.dot_dimension_numbers<[1], [0], [0], [1], [0, 0, 1, 1], [], []>} : vector<8x4xf32>, vector<4x512xf32>, vector<8x512xf32> -> vector<8x512xf32>
    %c0_4 = arith.constant 0 : index
    %c0_5 = arith.constant 0 : index
    %4 = vector.load %arg4[%c0_4, %c0_5] : memref<8x1xf32, #tpu.memory_space<vmem>>, vector<8x1xf32>
    %5 = vector.broadcast %4 : vector<8x1xf32> to vector<8x512xf32>
    %6 = arith.addf %3, %5 : vector<8x512xf32>
    %c0_6 = arith.constant 0 : index
    %c0_7 = arith.constant 0 : index
    %c0_8 = arith.constant 0 : index
    %7 = vector.load %arg5[%c0_6, %c0_7, %c0_8] : memref<1x8x512xf32, #tpu.memory_space<vmem>>, vector<1x8x512xf32>
    %8 = vector.shape_cast %7 : vector<1x8x512xf32> to vector<8x512xf32>
    %9 = vector.shape_cast %6 : vector<8x512xf32> to vector<1x8x512xf32>
    tpu.vector_store %arg5[%c0_6, %c0_7, %c0_8], %9 {strides = array<i32>} : memref<1x8x512xf32, #tpu.memory_space<vmem>>, vector<1x8x512xf32>,
    return
  }
  func.func @transform_0(%arg0: i32, %arg1: i32) -> (i32, i32) {
    %c0_i32 = arith.constant 0 : i32
    %c0_i32_0 = arith.constant 0 : i32
    %c0_i32_1 = arith.constant 0 : i32
    return %c0_i32, %c0_i32_0 : i32, i32
  }
  func.func @transform_1(%arg0: i32, %arg1: i32) -> (i32, i32, i32) {
    %c0_i32 = arith.constant 0 : i32
    %c0_i32_0 = arith.constant 0 : i32
    return %arg0, %c0_i32, %arg1 : i32, i32, i32
  }
  func.func @transform_2(%arg0: i32, %arg1: i32) -> (i32, i32) {
    %c0_i32 = arith.constant 0 : i32
    %c0_i32_0 = arith.constant 0 : i32
    %c0_i32_1 = arith.constant 0 : i32
    return %c0_i32, %c0_i32_0 : i32, i32
  }
  func.func @transform_3(%arg0: i32, %arg1: i32) -> (i32, i32, i32) {
    %c0_i32 = arith.constant 0 : i32
    %c0_i32_0 = arith.constant 0 : i32
    return %arg0, %c0_i32, %arg1 : i32, i32, i32
  }
}

</mosaic_0001>

<llo_original>
// kernel: tpu_custom_call.1
$region0: #{tpu_custom_call.1}
  #allocation0 [shape = 'u32[]', space=smem, size = 0x4, offset = 0x4, fixed_abs, tag = 'smem constant byte address 0x4 - core index']
  #allocation1 [shape = 'u32[144,128]{1,0:T(1,128)}', space=vmem, size = 0x12000, scoped, tag = 'internal scratch']
  %s0 = inlined_call_operand.vmem [shape: f32[8,4], index: 0, kind: input, shape index: {}]
  %s1 = inlined_call_operand.hbm [shape: f32[2,4,512], index: 1, kind: input, shape index: {}]
  %s2 = inlined_call_operand.vmem [shape: f32[8,1], index: 2, kind: input, shape index: {}]
  %s3 = inlined_call_operand.hbm [shape: f32[2,8,512], index: 3, kind: output, shape index: {}]
  %s4 = sld [smem:[#allocation0]]
  $region49: #{tpu_custom_call.1} parent=0
    _
  %s6 = ssub.s32 1, %s4
  %s7 = scalar_select 0, %s6, %s4
  $region1: #{tpu_custom_call.1} parent=0
    #allocation2 [shape = 'u8[16384]{0}', space=vmem, size = 0x4000, scoped, tag = 'input window, operand 1']
    #allocation3 [shape = 's32[2]{0}', space=sflag, size = 0x8, scoped, tag = 'scoped memory for tpu_custom_call.1']
    #allocation4 [shape = 's32[2]{0}', space=sflag, size = 0x8, scoped, tag = 'scoped memory for tpu_custom_call.1']
    #allocation5 [shape = 'u8[32768]{0}', space=vmem, size = 0x8000, scoped, tag = 'output window, operand 0']
    %8 = vsyncpa [#allocation3], 0
    %s9 = scalar_lea.sflag [#allocation3], 1
    %10 = vsyncpa %s9, 0
    %11 = vsyncpa [#allocation4], 0
    %s12 = scalar_lea.sflag [#allocation4], 1
    %13 = vsyncpa %s12, 0
    loop: start=0, step=1, limit=4
    $region2: #{tpu_custom_call.1} parent=1 // loop_pre_header
      _
    $region3: #{tpu_custom_call.1} parent=1 // loop_header
      %s15 = sphi 0, %s19
      %p16 = scmp.ge.s32.totalorder %s15, 4
      %s22 = sphi 0, %s34
      %s23 = sphi 0, %s30
      %s24 = sphi 0, %s22
      %s25 = sphi 0, %s23
      %s26 = sphi 0, %s24
      %s27 = sphi 0, %s25
      %s35 = sphi 0, %s35
      %s37 = sphi 0, %s35
      %s38 = sphi 0, %s37
      %s52 = sphi 0, %s38
      %s60 = sphi 0, %s62
      %s63 = sphi 0, %s60
      %s64 = sphi 0, %s63
      %s80 = sphi 0, %s64
      %s84 = sphi 0, %s84
      %s86 = sphi 0, %s84
      %s87 = sphi 0, %s86
      %s101 = sphi 0, %s87
      %s109 = sphi 0, %s111
      %s112 = sphi 0, %s109
      %s113 = sphi 0, %s112
      %s129 = sphi 0, %s113
    $region4: #{tpu_custom_call.1} parent=1 // loop_header_branch
      %18 = sbr.rel (%p16) target = $region8
    $region5: #{tpu_custom_call.1} parent=1 // loop_body
      %s20 = ssub.s32 %s15, 1
      %s21 = ssub.s32 %s15, 2
      %s28 = sadd.s32 1, %s23
      %p29 = scmp.ge.s32.totalorder %s28, 1
      %s30 = scalar_select %p29, 0, %s28
      %s31 = sadd.s32 1, %s22
      %s32 = scalar_select %p29, %s31, %s22
      %p33 = scmp.ge.s32.totalorder %s32, 2
      %s34 = scalar_select %p33, 0, %s32
      %s36 = sadd.s32 %s35, 1
      %p39 = scmp.eq.s32.totalorder %s15, 1
      %p40 = scmp.ne.s32.totalorder %s35, %s37
      %p41 = scmp.eq.s32.totalorder %s15, 0
      %p42 = por %p40, %p41
      %p43 = scmp.ne.s32.totalorder %s35, %s37
      %p44 = scmp.eq.s32.totalorder %s20, 1
      %p45 = por %p43, %p44
      %p46 = scmp.ne.s32.totalorder %s37, %s38
      %p47 = scmp.eq.s32.totalorder %s20, 0
      %p48 = por %p46, %p47
      %p49 = scmp.ne.s32.totalorder %s37, %s38
      %p50 = scmp.eq.s32.totalorder %s21, 1
      %p51 = por %p49, %p50
      %p53 = scmp.ne.s32.totalorder %s38, %s52
      %p54 = scmp.eq.s32.totalorder %s21, 0
      %p55 = por %p53, %p54
      %s56 = ssub.s32 %s22, %s34
      %s57 = ssub.s32 %s23, %s30
      %s58 = sor.u32 %s56, %s57
      %p59 = scmp.eq.s32.totalorder %s58, 0
      %s61 = sadd.s32 %s60, 1
      %s62 = scalar_select %p59, %s60, %s61
      %p65 = pneg %p59
      %p66 = scmp.eq.s32.totalorder %s15, 1
      %p67 = por %p65, %p66
      %p68 = scmp.ne.s32.totalorder %s60, %s63
      %p69 = scmp.eq.s32.totalorder %s15, 0
      %p70 = por %p68, %p69
      %p71 = scmp.ne.s32.totalorder %s60, %s63
      %p72 = scmp.eq.s32.totalorder %s20, 1
      %p73 = por %p71, %p72
      %p74 = scmp.ne.s32.totalorder %s63, %s64
      %p75 = scmp.eq.s32.totalorder %s20, 0
      %p76 = por %p74, %p75
      %p77 = scmp.ne.s32.totalorder %s63, %s64
      %p78 = scmp.eq.s32.totalorder %s21, 1
      %p79 = por %p77, %p78
      %p81 = scmp.ne.s32.totalorder %s64, %s80
      %p82 = scmp.eq.s32.totalorder %s21, 0
      %p83 = por %p81, %p82
      %s85 = sadd.s32 %s84, 1
      %p88 = scmp.eq.s32.totalorder %s15, 1
      %p89 = scmp.ne.s32.totalorder %s84, %s86
      %p90 = scmp.eq.s32.totalorder %s15, 0
      %p91 = por %p89, %p90
      %p92 = scmp.ne.s32.totalorder %s84, %s86
      %p93 = scmp.eq.s32.totalorder %s20, 1
      %p94 = por %p92, %p93
      %p95 = scmp.ne.s32.totalorder %s86, %s87
      %p96 = scmp.eq.s32.totalorder %s20, 0
      %p97 = por %p95, %p96
      %p98 = scmp.ne.s32.totalorder %s86, %s87
      %p99 = scmp.eq.s32.totalorder %s21, 1
      %p100 = por %p98, %p99
      %p102 = scmp.ne.s32.totalorder %s87, %s101
      %p103 = scmp.eq.s32.totalorder %s21, 0
      %p104 = por %p102, %p103
      %s105 = ssub.s32 %s22, %s34
      %s106 = ssub.s32 %s23, %s30
      %s107 = sor.u32 %s105, %s106
      %p108 = scmp.eq.s32.totalorder %s107, 0
      %s110 = sadd.s32 %s109, 1
      %s111 = scalar_select %p108, %s109, %s110
      %p114 = pneg %p108
      %p115 = scmp.eq.s32.totalorder %s15, 1
      %p116 = por %p114, %p115
      %p117 = scmp.ne.s32.totalorder %s109, %s112
      %p118 = scmp.eq.s32.totalorder %s15, 0
      %p119 = por %p117, %p118
      %p120 = scmp.ne.s32.totalorder %s109, %s112
      %p121 = scmp.eq.s32.totalorder %s20, 1
      %p122 = por %p120, %p121
      %p123 = scmp.ne.s32.totalorder %s112, %s113
      %p124 = scmp.eq.s32.totalorder %s20, 0
      %p125 = por %p123, %p124
      %p126 = scmp.ne.s32.totalorder %s112, %s113
      %p127 = scmp.eq.s32.totalorder %s21, 1
      %p128 = por %p126, %p127
      %p130 = scmp.ne.s32.totalorder %s113, %s129
      %p131 = scmp.eq.s32.totalorder %s21, 0
      %p132 = por %p130, %p131
      %p133 = scmp.le.s32.totalorder 1, %s15
      %p134 = scmp.lt.s32.totalorder %s15, 3
      %p135 = pnand %p133, %p134
      %p136 = pneg %p135
      // Predicated region
      $region9: #{tpu_custom_call.1} parent=5 // pred_check
        _
      $region10: #{tpu_custom_call.1} parent=5 // pred_check_branch
        %138 = sbr.rel (%p135) target = $region12
      $region11: #{tpu_custom_call.1} parent=5 // pred_region
        %s139 = ssub.s32 %s15, 1
        // Predicated region
        $region13: #{tpu_custom_call.1} parent=11 // pred_check
          %p140 = pneg %p48
        $region14: #{tpu_custom_call.1} parent=11 // pred_check_branch
          %142 = sbr.rel (%p140) target = $region16
        $region15: #{tpu_custom_call.1} parent=11 // pred_region
          _
        $region16: #{tpu_custom_call.1} parent=11 // pred_fallthru
          _
        // Predicated region
        $region17: #{tpu_custom_call.1} parent=11 // pred_check
          %p143 = pneg %p97
        $region18: #{tpu_custom_call.1} parent=11 // pred_check_branch
          %145 = sbr.rel (%p143) target = $region20
        $region19: #{tpu_custom_call.1} parent=11 // pred_region
          _
        $region20: #{tpu_custom_call.1} parent=11 // pred_fallthru
          _
      $region12: #{tpu_custom_call.1} parent=5 // pred_fallthru
        _
      %p146 = scmp.lt.s32.totalorder %s15, 2
      // Predicated region
      $region21: #{tpu_custom_call.1} parent=5 // pred_check
        %p147 = pneg %p146
      $region22: #{tpu_custom_call.1} parent=5 // pred_check_branch
        %149 = sbr.rel (%p147) target = $region24
      $region23: #{tpu_custom_call.1} parent=5 // pred_region
        // Predicated region
        $region25: #{tpu_custom_call.1} parent=23 // pred_check
          %p150 = pneg %p70
        $region26: #{tpu_custom_call.1} parent=23 // pred_check_branch
          %152 = sbr.rel (%p150) target = $region28
        $region27: #{tpu_custom_call.1} parent=23 // pred_region
          %s153 = sand.u32 %s60, 1
          %s154 = scalar_lea.sflag [#allocation3], %s153
          %s155 = sand.u32 %s60, 1
          %s156 = smul.addr %s155, 16
          %s157 = scalar_lea.vmem [#allocation2], %s156
          %s158 = smul.u32 4, %s23
          %s160 = ssub.s32 256, 256
          %161 = vsyncadd %s154, %s160
          %s162 = smul.addr %s22, 4
          %s163 = sadd.s32 %s158, %s162
          %s164 = smul.addr %s163, 64
          %s165 = scalar_lea.hbm %s1, %s164
          %s167 = sshll.u32 %s157, 4
          %s168 = int_to_ptr.vmem [resolvable:$true] %s167
          %170 = dma.hbm_to_vmem [thread:$0]  %s165, 256, %s168, %s154
        $region28: #{tpu_custom_call.1} parent=23 // pred_fallthru
          _
      $region24: #{tpu_custom_call.1} parent=5 // pred_fallthru
        _
      %p171 = scmp.le.s32.totalorder 1, %s15
      %p172 = scmp.lt.s32.totalorder %s15, 3
      %p173 = pnand %p171, %p172
      %p174 = pneg %p173
      // Predicated region
      $region29: #{tpu_custom_call.1} parent=5 // pred_check
        _
      $region30: #{tpu_custom_call.1} parent=5 // pred_check_branch
        %176 = sbr.rel (%p173) target = $region32
      $region31: #{tpu_custom_call.1} parent=5 // pred_region
        %s177 = ssub.s32 %s15, 1
        %s178 = sand.u32 %s63, 1
        %s179 = scalar_lea.sflag [#allocation3], %s178
        %s180 = sand.u32 %s63, 1
        %s181 = smul.addr %s180, 16
        %s182 = scalar_lea.vmem [#allocation2], %s181
        // Predicated region
        $region33: #{tpu_custom_call.1} parent=31 // pred_check
          %p183 = pneg %p76
        $region34: #{tpu_custom_call.1} parent=31 // pred_check_branch
          %185 = sbr.rel (%p183) target = $region36
        $region35: #{tpu_custom_call.1} parent=31 // pred_region
          %186 = dma.done %s179, 256
        $region36: #{tpu_custom_call.1} parent=31 // pred_fallthru
          _
        %p187 = pneg %p48
        %p188 = pneg %p45
        %s189 = sand.u32 %s63, 1
        %s190 = scalar_lea.sflag [#allocation3], %s189
        %s191 = sand.u32 %s63, 1
        %s192 = smul.addr %s191, 16
        %s193 = scalar_lea.vmem [#allocation2], %s192
        %p194 = pneg %p76
        %p195 = pneg %p73
        %p196 = pneg %p97
        %p197 = pneg %p94
        %p198 = pneg %p125
        %p199 = pneg %p122
        %s200 = sand.u32 %s112, 1
        %s201 = scalar_lea.sflag [#allocation4], %s200
        %s202 = sand.u32 %s112, 1
        %s203 = smul.addr %s202, 32
        %s204 = scalar_lea.vmem [#allocation5], %s203
        %s205 = smul.u32 4, %s25
        %s206 = smul.u32 4, %s25
        %v207 = vld [vmem:[%s0] sm:$0xff]
        %v208 = vld [vmem:[%s182] sm:$0xff]
        %v209 = vld [vmem:[%s182 + $0x8] sm:$0xff]
        %v210 = vld [vmem:[%s2] sm:$0xff]
        %212 = vset.pattern.permute.xlu0 0
        %213 = vperm.xlu0 %212, %v210
        %v214 = vpop.permute.xlu0 %213
        %v218 = vcombine.high %v208, %v208
        %v219 = vcombine.high %v209, %v209
        %vm220 = vcmask 31744
        %v222 = vsel %vm220, %v207, 0
        %vm224 = vcmask 1043456
        %v225 = vsel %vm224, %v208, 0
        %v227 = vsel %vm224, %v218, 0
        %v229 = vsel %vm224, %v209, 0
        %v231 = vsel %vm224, %v219, 0
        %233 = vmatprep.subr.mxu0 %v227
        %234 = vmatpush1.msra.mxu0 %v225
        %235 = vmatprep.subr.mxu0 0.0
        %236 = vmatpush1.msra.mxu0 0.0
        %237 = vmatprep.subr.mxu0 0.0
        %238 = vmatpush1.msra.mxu0 0.0
        %239 = vmatprep.subr.mxu0 0.0
        %240 = vmatpush1.msra.mxu0 0.0
        %241 = vmatprep.subr.mxu0 0.0
        %242 = vmatpush1.msra.mxu0 0.0
        %243 = vmatprep.subr.mxu0 0.0
        %244 = vmatpush1.msra.mxu0 0.0
        %245 = vmatprep.subr.mxu0 0.0
        %246 = vmatpush1.msra.mxu0 0.0
        %247 = vmatprep.subr.mxu0 0.0
        %248 = vmatpush1.msra.mxu0 0.0
        %249 = vmatprep.subr.mxu0 0.0
        %250 = vmatpush1.msra.mxu0 0.0
        %251 = vmatprep.subr.mxu0 0.0
        %252 = vmatpush1.msra.mxu0 0.0
        %253 = vmatprep.subr.mxu0 0.0
        %254 = vmatpush1.msra.mxu0 0.0
        %255 = vmatprep.subr.mxu0 0.0
        %256 = vmatpush1.msra.mxu0 0.0
        %257 = vmatprep.subr.mxu0 0.0
        %258 = vmatpush1.msra.mxu0 0.0
        %259 = vmatprep.subr.mxu0 0.0
        %260 = vmatpush1.msra.mxu0 0.0
        %261 = vmatprep.subr.mxu0 0.0
        %262 = vmatpush1.msra.mxu0 0.0
        %263 = vmatprep.subr.mxu0 0.0
        %264 = vmatpush1.msra.mxu0 0.0
        %265 = vmatprep.subr.mxu0 0.0
        %266 = vmatpush1.msra.mxu0 0.0
        %267 = vmatprep.subr.mxu0 0.0
        %268 = vmatpush1.msra.mxu0 0.0
        %269 = vmatprep.subr.mxu0 0.0
        %270 = vmatpush1.msra.mxu0 0.0
        %271 = vmatprep.subr.mxu0 0.0
        %272 = vmatpush1.msra.mxu0 0.0
        %273 = vmatprep.subr.mxu0 0.0
        %274 = vmatpush1.msra.mxu0 0.0
        %275 = vmatprep.subr.mxu0 0.0
        %276 = vmatpush1.msra.mxu0 0.0
        %277 = vmatprep.subr.mxu0 0.0
        %278 = vmatpush1.msra.mxu0 0.0
        %279 = vmatprep.subr.mxu0 0.0
        %280 = vmatpush1.msra.mxu0 0.0
        %281 = vmatprep.subr.mxu0 0.0
        %282 = vmatpush1.msra.mxu0 0.0
        %283 = vmatprep.subr.mxu0 0.0
        %284 = vmatpush1.msra.mxu0 0.0
        %285 = vmatprep.subr.mxu0 0.0
        %286 = vmatpush1.msra.mxu0 0.0
        %287 = vmatprep.subr.mxu0 0.0
        %288 = vmatpush1.msra.mxu0 0.0
        %289 = vmatprep.subr.mxu0 0.0
        %290 = vmatpush1.msra.mxu0 0.0
        %291 = vmatprep.subr.mxu0 0.0
        %292 = vmatpush1.msra.mxu0 0.0
        %293 = vmatprep.subr.mxu0 0.0
        %294 = vmatpush1.msra.mxu0 0.0
        %295 = vmatprep.subr.mxu0 0.0
        %296 = vmatpush1.msra.mxu0 0.0
        %297 = vmatprep.mubr.f32.mxu0 0.0
        %298 = vmatmul.mubr.f32.gmra.mrb[0].mxu0 %v222
        %v299 = vpop.f32.mrb[0].mxu0
        %v300 = vadd.f32 %v214, %v299
        %v301 = vpop.f32.mrb[0].mxu0
        %v302 = vadd.f32 %v214, %v301
        %303 = vdwg.mxu0
        %304 = vmatprep.subr.mxu0 %v231
        %305 = vmatpush1.msra.mxu0 %v229
        %306 = vmatprep.subr.mxu0 0.0
        %307 = vmatpush1.msra.mxu0 0.0
        %308 = vmatprep.subr.mxu0 0.0
        %309 = vmatpush1.msra.mxu0 0.0
        %310 = vmatprep.subr.mxu0 0.0
        %311 = vmatpush1.msra.mxu0 0.0
        %312 = vmatprep.subr.mxu0 0.0
        %313 = vmatpush1.msra.mxu0 0.0
        %314 = vmatprep.subr.mxu0 0.0
        %315 = vmatpush1.msra.mxu0 0.0
        %316 = vmatprep.subr.mxu0 0.0
        %317 = vmatpush1.msra.mxu0 0.0
        %318 = vmatprep.subr.mxu0 0.0
        %319 = vmatpush1.msra.mxu0 0.0
        %320 = vmatprep.subr.mxu0 0.0
        %321 = vmatpush1.msra.mxu0 0.0
        %322 = vmatprep.subr.mxu0 0.0
        %323 = vmatpush1.msra.mxu0 0.0
        %324 = vmatprep.subr.mxu0 0.0
        %325 = vmatpush1.msra.mxu0 0.0
        %326 = vmatprep.subr.mxu0 0.0
        %327 = vmatpush1.msra.mxu0 0.0
        %328 = vmatprep.subr.mxu0 0.0
        %329 = vmatpush1.msra.mxu0 0.0
        %330 = vmatprep.subr.mxu0 0.0
        %331 = vmatpush1.msra.mxu0 0.0
        %332 = vmatprep.subr.mxu0 0.0
        %333 = vmatpush1.msra.mxu0 0.0
        %334 = vmatprep.subr.mxu0 0.0
        %335 = vmatpush1.msra.mxu0 0.0
        %336 = vmatprep.subr.mxu0 0.0
        %337 = vmatpush1.msra.mxu0 0.0
        %338 = vmatprep.subr.mxu0 0.0
        %339 = vmatpush1.msra.mxu0 0.0
        %340 = vmatprep.subr.mxu0 0.0
        %341 = vmatpush1.msra.mxu0 0.0
        %342 = vmatprep.subr.mxu0 0.0
        %343 = vmatpush1.msra.mxu0 0.0
        %344 = vmatprep.subr.mxu0 0.0
        %345 = vmatpush1.msra.mxu0 0.0
        %346 = vmatprep.subr.mxu0 0.0
        %347 = vmatpush1.msra.mxu0 0.0
        %348 = vmatprep.subr.mxu0 0.0
        %349 = vmatpush1.msra.mxu0 0.0
        %350 = vmatprep.subr.mxu0 0.0
        %351 = vmatpush1.msra.mxu0 0.0
        %352 = vmatprep.subr.mxu0 0.0
        %353 = vmatpush1.msra.mxu0 0.0
        %354 = vmatprep.subr.mxu0 0.0
        %355 = vmatpush1.msra.mxu0 0.0
        %356 = vmatprep.subr.mxu0 0.0
        %357 = vmatpush1.msra.mxu0 0.0
        %358 = vmatprep.subr.mxu0 0.0
        %359 = vmatpush1.msra.mxu0 0.0
        %360 = vmatprep.subr.mxu0 0.0
        %361 = vmatpush1.msra.mxu0 0.0
        %362 = vmatprep.subr.mxu0 0.0
        %363 = vmatpush1.msra.mxu0 0.0
        %364 = vmatprep.subr.mxu0 0.0
        %365 = vmatpush1.msra.mxu0 0.0
        %366 = vmatprep.subr.mxu0 0.0
        %367 = vmatpush1.msra.mxu0 0.0
        %368 = vmatprep.mubr.f32.mxu0 0.0
        %369 = vmatmul.mubr.f32.gmra.mrb[0].mxu0 %v222
        %v370 = vpop.f32.mrb[0].mxu0
        %v371 = vadd.f32 %v214, %v370
        %v372 = vpop.f32.mrb[0].mxu0
        %v373 = vadd.f32 %v214, %v372
        %374 = vdwg.mxu0
        %375 = vst [vmem:[%s204] sm:$0xff] %v300
        %376 = vst [vmem:[%s204 + $0x8] sm:$0xff] %v302
        %377 = vst [vmem:[%s204 + $0x10] sm:$0xff] %v371
        %378 = vst [vmem:[%s204 + $0x18] sm:$0xff] %v373
        %s379 = sand.u32 %s112, 1
        %s380 = scalar_lea.sflag [#allocation4], %s379
        %s381 = sand.u32 %s112, 1
        %s382 = smul.addr %s381, 32
        %s383 = scalar_lea.vmem [#allocation5], %s382
        // Predicated region
        $region37: #{tpu_custom_call.1} parent=31 // pred_check
          %p384 = pneg %p122
        $region38: #{tpu_custom_call.1} parent=31 // pred_check_branch
          %386 = sbr.rel (%p384) target = $region40
        $region39: #{tpu_custom_call.1} parent=31 // pred_region
          %s387 = smul.u32 4, %s25
          %s389 = ssub.s32 512, 512
          %390 = vsyncadd %s380, %s389
          %s391 = smul.addr %s24, 4
          %s392 = sadd.s32 %s387, %s391
          %s393 = smul.addr %s392, 128
          %s394 = scalar_lea.hbm %s3, %s393
          %s396 = sshll.u32 %s383, 4
          %s397 = int_to_ptr.vmem [resolvable:$true] %s396
          %399 = dma.vmem_to_hbm [thread:$0]  %s397, 512, %s394, %s380
        $region40: #{tpu_custom_call.1} parent=31 // pred_fallthru
          _
      $region32: #{tpu_custom_call.1} parent=5 // pred_fallthru
        _
      %p400 = scmp.le.s32.totalorder 2, %s15
      // Predicated region
      $region41: #{tpu_custom_call.1} parent=5 // pred_check
        %p401 = pneg %p400
      $region42: #{tpu_custom_call.1} parent=5 // pred_check_branch
        %403 = sbr.rel (%p401) target = $region44
      $region43: #{tpu_custom_call.1} parent=5 // pred_region
        %s404 = ssub.s32 %s15, 2
        // Predicated region
        $region45: #{tpu_custom_call.1} parent=43 // pred_check
          %p405 = pneg %p128
        $region46: #{tpu_custom_call.1} parent=43 // pred_check_branch
          %407 = sbr.rel (%p405) target = $region48
        $region47: #{tpu_custom_call.1} parent=43 // pred_region
          %s408 = sand.u32 %s113, 1
          %s409 = scalar_lea.sflag [#allocation4], %s408
          %s410 = sand.u32 %s113, 1
          %s411 = smul.addr %s410, 32
          %s412 = scalar_lea.vmem [#allocation5], %s411
          %413 = dma.done %s409, 512
        $region48: #{tpu_custom_call.1} parent=43 // pred_fallthru
          _
      $region44: #{tpu_custom_call.1} parent=5 // pred_fallthru
        _
    $region6: #{tpu_custom_call.1} parent=1 // loop_footer
      %s19 = sadd.s32 1, %s15
    $region7: #{tpu_custom_call.1} parent=1 // loop_footer_branch
      %14 = sbr.rel target = $region3
    $region8: #{tpu_custom_call.1} parent=1 // loop_exit
      _
    %414 = vsyncpa [#allocation3], 1
    %s415 = scalar_lea.sflag [#allocation3], 1
    %416 = vsyncpa %s415, 1
    %417 = vsyncpa [#allocation4], 1
    %s418 = scalar_lea.sflag [#allocation4], 1
    %419 = vsyncpa %s418, 1

</llo_original>
